<compile_context>
chip_gen: v6e
topology: v6e:2x2x1
jax: 0.10.0
libtpu: 0.0.40
codegen_flags: <defaults>
</compile_context>

<pallas_src>
import functools

import jax
import jax.numpy as jnp
from jax import lax
from jax.experimental import pallas as pl
from jax.experimental.pallas import tpu as pltpu

_LANES = 128


def _cdiv(a, b):
    return (a + b - 1) // b


def _int_pow(y, p):
    """y ** p using VPU multiplies when p is a small non-negative integer.

    Falls back to jnp.power (EUP exp/log path) only for non-integer exponents.
    """
    pf = float(p)
    if pf.is_integer() and 0 <= pf <= 16:
        n = int(pf)
        if n == 0:
            return jnp.ones_like(y)
        result = None
        base = y
        while n > 0:                        # exponentiation by squaring
            if n & 1:
                result = base if result is None else result * base
            n >>= 1
            if n:
                base = base * base
        return result
    return jnp.power(y, jnp.float32(pf))


def _tensorcores_per_chip() -> int:
    """Shard the streaming loop across TensorCores only on multi-TC chips."""
    try:
        kind = jax.local_devices()[0].device_kind.lower()
    except Exception:  # pragma: no cover - defensive, e.g. no devices yet
        return 1
    # v7x-class chips have 2 TensorCores per chip; v5e/v6e have 1, where the
    # extra slice would only add duplicate-tile DMAs and doubled init/writeback.
    if "7" in kind:
        return 2
    return 1


def _focal_kernel(x_ref, t_ref, loss_acc_ref, npos_acc_ref, *,
                  factor_pos_class, alpha, beta, rows, steps, tile_rows,
                  need_mask):
    c = pl.program_id(0)          # parallel slice (megacore axis)
    i = pl.program_id(1)          # reduction step within the slice

    # Widen in VMEM only (inputs stay in their native dtype in HBM).
    x = x_ref[...].astype(jnp.float32)
    t = t_ref[...].astype(jnp.float32)

    b = jnp.float32(factor_pos_class)

    is_pos = t == jnp.float32(1.0)
    is_neg = t < jnp.float32(1.0)

    one_m_x = 1.0 - x                       # reused for pow and the log arg
    pow_1mx_a = _int_pow(one_m_x, alpha)    # (1 - x)^alpha  -> VPU muls
    pow_x_a = _int_pow(x, alpha)            # x^alpha        -> VPU muls
    pow_1mt_b = _int_pow(1.0 - t, beta)     # (1 - t)^beta   -> VPU muls

    # Weight-folded selects + single fused log (indicators mutually exclusive):
    #   pos: b      * (1-x)^a           * log(x)
    #   neg: (1-b)  * (1-t)^beta * x^a  * log(1-x)
    pos_term = jnp.where(is_pos, b * pow_1mx_a, jnp.float32(0.0))
    neg_term = jnp.where(is_neg, (1.0 - b) * pow_1mt_b * pow_x_a,
                         jnp.float32(0.0))
    log_arg = jnp.where(is_pos, x, one_m_x)
    loss = (pos_term + neg_term) * jnp.log(log_arg)     # one EUP log / elem
    pos_cnt = jnp.where(is_pos, jnp.float32(1.0), jnp.float32(0.0))

    if need_mask:
        # Ragged row tail and/or clamped duplicate tiles: mask only the final
        # per-element contributions (select is NaN-safe for the forward value
        # against garbage in the padded / re-read rows).
        tile_idx = c * steps + i
        row_ids = (lax.broadcasted_iota(jnp.int32, (tile_rows, _LANES), 0)
                   + tile_idx * tile_rows)
        valid = row_ids < rows
        loss = jnp.where(valid, loss, jnp.float32(0.0))
        pos_cnt = jnp.where(valid, pos_cnt, jnp.float32(0.0))

    # Sublane-group reduce (tile_rows,128) -> (8,128): pure VPU adds on
    # aligned (8,128) tiles; keeps the accumulators tiny and lane-dense.
    loss_red = jnp.sum(loss.reshape(tile_rows // 8, 8, _LANES), axis=0)
    pos_red = jnp.sum(pos_cnt.reshape(tile_rows // 8, 8, _LANES), axis=0)

    @pl.when(i == 0)
    def _init():
        loss_acc_ref[...] = jnp.zeros_like(loss_acc_ref)
        npos_acc_ref[...] = jnp.zeros_like(npos_acc_ref)

    loss_acc_ref[...] += loss_red[None]
    npos_acc_ref[...] += pos_red[None]


def _plain_partial(x, t, factor_pos_class, alpha, beta):
    """Reference math on a small flat slice; returns (loss_sum, num_pos)."""
    x = x.astype(jnp.float32)
    t = t.astype(jnp.float32)
    b = jnp.float32(factor_pos_class)
    pos_ind = (t == 1.0).astype(jnp.float32)
    neg_ind = (t < 1.0).astype(jnp.float32)
    pos_l = b * pos_ind * jnp.power(1.0 - x, alpha) * jnp.log(x + neg_ind)
    neg_l = ((1.0 - b) * neg_ind * jnp.power(1.0 - t, beta)
             * jnp.power(x, alpha) * jnp.log(1.0 - x + pos_ind))
    return jnp.sum(pos_l + neg_l), jnp.sum(pos_ind)


def balanced_penalty_reduced_focal_loss(inputs, targets,
                                        factor_pos_class=0.5,
                                        alpha=2.0, beta=4.0,
                                        tile_rows=2048,
                                        num_slices=None):
    """inputs / targets: (batch, channels, height, width), same shape."""
    if inputs.shape != targets.shape:
        raise ValueError("inputs and targets must have the same shape")

    x_flat = inputs.reshape(-1)
    t_flat = targets.reshape(-1)
    n = x_flat.shape[0]
    rows = n // _LANES

    loss_sum = jnp.float32(0.0)
    num_pos = jnp.float32(0.0)
    tail_start = 0

    if rows >= 16:
        n_main = rows * _LANES
        if n_main == n:
            # Free bitcast reshape into a lane-dense (rows, 128) slab.
            x2 = x_flat.reshape(rows, _LANES)
            t2 = t_flat.reshape(rows, _LANES)
        else:
            # <128-element lane remainder handled in plain JAX below; the
            # kernel runs on the multiple-of-128 prefix (no full jnp.pad).
            x2 = x_flat[:n_main].reshape(rows, _LANES)
            t2 = t_flat[:n_main].reshape(rows, _LANES)

        # 1 MiB f32 blocks per input (tile_rows=2048); rounded to 16 sublanes
        # so bf16 inputs tile cleanly, and never larger than the array.
        tile_rows = max(16, (int(tile_rows) // 16) * 16)
        tr = min(tile_rows, (rows // 16) * 16)

        total_blocks = _cdiv(rows, tr)
        ns = _tensorcores_per_chip() if num_slices is None else int(num_slices)
        ns = max(1, min(ns, total_blocks))
        steps = _cdiv(total_blocks, ns)
        # Masking is only compiled in when statically required.
        need_mask = (rows % tr != 0) or (ns * steps != total_blocks)

        kernel = functools.partial(
            _focal_kernel,
            factor_pos_class=float(factor_pos_class),
            alpha=float(alpha), beta=float(beta),
            rows=rows, steps=steps, tile_rows=tr, need_mask=need_mask)

        def in_map(c, i):
            # Clamp so (rare) overhanging tiles of the last slice re-read the
            # final block; their contribution is fully masked off in-kernel.
            return (jnp.minimum(c * steps + i, total_blocks - 1), 0)

        acc_spec = pl.BlockSpec((1, 8, _LANES), lambda c, i: (c, 0, 0))

        loss_part, npos_part = pl.pallas_call(
            kernel,
            out_shape=(jax.ShapeDtypeStruct((ns, 8, _LANES), jnp.float32),
                       jax.ShapeDtypeStruct((ns, 8, _LANES), jnp.float32)),
            grid_spec=pltpu.PrefetchScalarGridSpec(
                num_scalar_prefetch=0,
                grid=(ns, steps),
                in_specs=[pl.BlockSpec((tr, _LANES), in_map),
                          pl.BlockSpec((tr, _LANES), in_map)],
                out_specs=(acc_spec, acc_spec)),
            compiler_params=pltpu.CompilerParams(
                dimension_semantics=("parallel", "arbitrary"),
                # Explicit scoped-VMEM budget: covers the 1 MiB double-buffered
                # input blocks + block-sized intermediates (~12-16 MiB) on all
                # of v5e (16 MiB default) / v6e / v7x, well under physical.
                vmem_limit_bytes=32 * 1024 * 1024),
        )(x2, t2)

        loss_sum = loss_sum + jnp.sum(loss_part)
        num_pos = num_pos + jnp.sum(npos_part)
        tail_start = n_main

    if tail_start < n:
        # <128-element lane remainder (or a tiny <16-row input): plain JAX.
        ls, npos_t = _plain_partial(x_flat[tail_start:], t_flat[tail_start:],
                                    factor_pos_class, alpha, beta)
        loss_sum = loss_sum + ls
        num_pos = num_pos + npos_t

    # When num_pos == 0 the positive part is exactly 0, so -loss_sum equals the
    # reference's -neg_loss.sum() branch.  The max() keeps the unselected
    # division finite under autodiff without changing the forward value.
    safe_den = jnp.maximum(num_pos, jnp.float32(1.0))
    return jnp.where(num_pos == 0.0, -loss_sum, -loss_sum / safe_den)


def _reference(inputs, targets, factor_pos_class=0.5, alpha=2.0, beta=4.0):
    """Pure-JAX reference mirroring the PyTorch forward."""
    inputs = inputs.astype(jnp.float32)
    targets = targets.astype(jnp.float32)
    pos_ind = (targets == 1.0).astype(jnp.float32)
    neg_ind = (targets < 1.0).astype(jnp.float32)
    pos_loss = factor_pos_class * pos_ind * jnp.power(1 - inputs, alpha) \
        * jnp.log(inputs + neg_ind)
    neg_loss = (1 - factor_pos_class) * neg_ind * jnp.power(1 - targets, beta) \
        * jnp.power(inputs, alpha) * jnp.log(1 - inputs + pos_ind)
    num_pos = pos_ind.sum()
    return jnp.where(num_pos == 0.0,
                     -neg_loss.sum(),
                     -(pos_loss.sum() + neg_loss.sum()) / num_pos)


def _make_inputs(key, shape):
    k1, k2 = jax.random.split(key)
    preds = jax.nn.sigmoid(jax.random.normal(k1, shape, jnp.float32))
    u = jax.random.uniform(k2, shape, jnp.float32)
    tgts = jnp.where(u > 0.95, jnp.float32(1.0), u * 0.9)
    return preds, tgts


if __name__ == "__main__":
    key = jax.random.PRNGKey(0)
    keys = jax.random.split(key, 6)

    def check(out, ref):
        assert jnp.allclose(out, ref, rtol=1e-4, atol=1e-6), (out, ref)

    # 1) Base case: 128-aligned, single tile, no masking.
    x1, t1 = _make_inputs(keys[0], (2, 4, 16, 16))
    out1 = jax.block_until_ready(balanced_penalty_reduced_focal_loss(x1, t1))
    check(out1, _reference(x1, t1))

    # 2) 128-aligned but ragged row tail inside the last block (rows=60, tr=48).
    x2, t2 = _make_inputs(keys[1], (2, 4, 24, 40))
    out2 = jax.block_until_ready(balanced_penalty_reduced_focal_loss(x2, t2))
    check(out2, _reference(x2, t2))

    # 3) Multi-step accumulation (rows=80, tr=16 -> 5 blocks), single slice.
    x3, t3 = _make_inputs(keys[2], (2, 4, 40, 32))
    out3 = jax.block_until_ready(
        balanced_penalty_reduced_focal_loss(x3, t3, tile_rows=16))
    check(out3, _reference(x3, t3))

    # 3b) Forced 2-slice split with odd block count -> exercises the clamped,
    #      fully-masked duplicate tile path (what v7x's 2 TCs would use).
    out3b = jax.block_until_ready(
        balanced_penalty_reduced_focal_loss(x3, t3, tile_rows=16, num_slices=2))
    check(out3b, _reference(x3, t3))

    # 4) Element count not a multiple of 128: kernel on the prefix + plain-JAX
    #    lane tail (n = 2584 -> rows = 20, remainder = 24).
    x4, t4 = _make_inputs(keys[3], (2, 4, 17, 19))
    out4 = jax.block_until_ready(balanced_penalty_reduced_focal_loss(x4, t4))
    check(out4, _reference(x4, t4))

    # 5) No positive pixels -> exercises the num_pos == 0 branch.
    x5, _ = _make_inputs(keys[4], (2, 4, 16, 16))
    t5 = jax.random.uniform(keys[5], (2, 4, 16, 16), jnp.float32) * 0.9
    out5 = jax.block_until_ready(balanced_penalty_reduced_focal_loss(x5, t5))
    check(out5, _reference(x5, t5))

    print("KERNEL_OK")
</pallas_src>

<mosaic_0001>
module attributes {stable_mosaic.version = 11 : i64} {
  func.func @_focal_kernel(%arg0: i32, %arg1: i32, %arg2: memref<16x128xf32, #tpu.memory_space<vmem>>, %arg3: memref<16x128xf32, #tpu.memory_space<vmem>>, %arg4: memref<1x8x128xf32, #tpu.memory_space<vmem>>, %arg5: memref<1x8x128xf32, #tpu.memory_space<vmem>>) attributes {dimension_semantics = [#tpu.dimension_semantics<parallel>, #tpu.dimension_semantics<arbitrary>], iteration_bounds = array<i64: 1, 1>, scalar_prefetch = 0 : i64, scratch_operands = 0 : i64, tpu.core_type = #tpu.core_type<tc>, window_params = [{transform_indices = @transform_0, window_bounds = array<i64: 16, 128>}, {transform_indices = @transform_1, window_bounds = array<i64: 16, 128>}, {transform_indices = @transform_2, window_bounds = array<i64: 1, 8, 128>}, {transform_indices = @transform_3, window_bounds = array<i64: 1, 8, 128>}]} {
    %c0 = arith.constant 0 : index
    %c0_0 = arith.constant 0 : index
    %0 = vector.load %arg2[%c0, %c0_0] : memref<16x128xf32, #tpu.memory_space<vmem>>, vector<16x128xf32>
    %c0_1 = arith.constant 0 : index
    %c0_2 = arith.constant 0 : index
    %1 = vector.load %arg3[%c0_1, %c0_2] : memref<16x128xf32, #tpu.memory_space<vmem>>, vector<16x128xf32>
    %cst = arith.constant 1.000000e+00 : f32
    %2 = vector.broadcast %cst : f32 to vector<16x128xf32>
    %3 = arith.cmpf oeq, %1, %2 : vector<16x128xf32>
    %cst_3 = arith.constant 1.000000e+00 : f32
    %4 = vector.broadcast %cst_3 : f32 to vector<16x128xf32>
    %5 = arith.cmpf olt, %1, %4 : vector<16x128xf32>
    %cst_4 = arith.constant 1.000000e+00 : f32
    %6 = vector.broadcast %cst_4 : f32 to vector<16x128xf32>
    %7 = arith.subf %6, %0 : vector<16x128xf32>
    %8 = arith.mulf %7, %7 : vector<16x128xf32>
    %9 = arith.mulf %0, %0 : vector<16x128xf32>
    %cst_5 = arith.constant 1.000000e+00 : f32
    %10 = vector.broadcast %cst_5 : f32 to vector<16x128xf32>
    %11 = arith.subf %10, %1 : vector<16x128xf32>
    %12 = arith.mulf %11, %11 : vector<16x128xf32>
    %13 = arith.mulf %12, %12 : vector<16x128xf32>
    %cst_6 = arith.constant 5.000000e-01 : f32
    %14 = vector.broadcast %cst_6 : f32 to vector<16x128xf32>
    %15 = arith.mulf %14, %8 : vector<16x128xf32>
    %cst_7 = arith.constant 0.000000e+00 : f32
    %16 = vector.broadcast %cst_7 : f32 to vector<16x128xf32>
    %17 = arith.select %3, %15, %16 : vector<16x128xi1>, vector<16x128xf32>
    %cst_8 = arith.constant 1.000000e+00 : f32
    %cst_9 = arith.constant 5.000000e-01 : f32
    %18 = arith.subf %cst_8, %cst_9 : f32
    %19 = vector.broadcast %18 : f32 to vector<16x128xf32>
    %20 = arith.mulf %19, %13 : vector<16x128xf32>
    %21 = arith.mulf %20, %9 : vector<16x128xf32>
    %cst_10 = arith.constant 0.000000e+00 : f32
    %22 = vector.broadcast %cst_10 : f32 to vector<16x128xf32>
    %23 = arith.select %5, %21, %22 : vector<16x128xi1>, vector<16x128xf32>
    %24 = arith.select %3, %0, %7 : vector<16x128xi1>, vector<16x128xf32>
    %25 = arith.addf %17, %23 : vector<16x128xf32>
    %26 = math.log %24 : vector<16x128xf32>
    %27 = arith.mulf %25, %26 : vector<16x128xf32>
    %cst_11 = arith.constant 1.000000e+00 : f32
    %cst_12 = arith.constant 0.000000e+00 : f32
    %28 = vector.broadcast %cst_11 : f32 to vector<16x128xf32>
    %29 = vector.broadcast %cst_12 : f32 to vector<16x128xf32>
    %30 = arith.select %3, %28, %29 : vector<16x128xi1>, vector<16x128xf32>
    %31 = vector.shape_cast %27 : vector<16x128xf32> to vector<2x8x128xf32>
    %cst_13 = arith.constant dense<0.000000e+00> : vector<8x128xf32>
    %32 = vector.multi_reduction <add>, %31, %cst_13 [0] : vector<2x8x128xf32> to vector<8x128xf32>
    %33 = vector.shape_cast %30 : vector<16x128xf32> to vector<2x8x128xf32>
    %cst_14 = arith.constant dense<0.000000e+00> : vector<8x128xf32>
    %34 = vector.multi_reduction <add>, %33, %cst_14 [0] : vector<2x8x128xf32> to vector<8x128xf32>
    %c0_i32 = arith.constant 0 : i32
    %35 = arith.cmpi eq, %arg1, %c0_i32 : i32
    %36 = arith.extui %35 : i1 to i32
    %c0_i32_15 = arith.constant 0 : i32
    %37 = arith.cmpi ne, %36, %c0_i32_15 : i32
    scf.if %37 {
      %cst_28 = arith.constant 0.000000e+00 : f32
      %46 = vector.broadcast %cst_28 : f32 to vector<1x8x128xf32>
      %c0_29 = arith.constant 0 : index
      %c0_30 = arith.constant 0 : index
      %c0_31 = arith.constant 0 : index
      %47 = vector.load %arg4[%c0_29, %c0_30, %c0_31] : memref<1x8x128xf32, #tpu.memory_space<vmem>>, vector<1x8x128xf32>
      tpu.vector_store %arg4[%c0_29, %c0_30, %c0_31], %46 {strides = array<i32>} : memref<1x8x128xf32, #tpu.memory_space<vmem>>, vector<1x8x128xf32>,
      %cst_32 = arith.constant 0.000000e+00 : f32
      %48 = vector.broadcast %cst_32 : f32 to vector<1x8x128xf32>
      %c0_33 = arith.constant 0 : index
      %c0_34 = arith.constant 0 : index
      %c0_35 = arith.constant 0 : index
      %49 = vector.load %arg5[%c0_33, %c0_34, %c0_35] : memref<1x8x128xf32, #tpu.memory_space<vmem>>, vector<1x8x128xf32>
      tpu.vector_store %arg5[%c0_33, %c0_34, %c0_35], %48 {strides = array<i32>} : memref<1x8x128xf32, #tpu.memory_space<vmem>>, vector<1x8x128xf32>,
    } else {
    }
    %c0_16 = arith.constant 0 : index
    %c0_17 = arith.constant 0 : index
    %c0_18 = arith.constant 0 : index
    %38 = vector.load %arg4[%c0_16, %c0_17, %c0_18] : memref<1x8x128xf32, #tpu.memory_space<vmem>>, vector<1x8x128xf32>
    %39 = vector.shape_cast %32 : vector<8x128xf32> to vector<1x8x128xf32>
    %40 = arith.addf %38, %39 : vector<1x8x128xf32>
    %c0_19 = arith.constant 0 : index
    %c0_20 = arith.constant 0 : index
    %c0_21 = arith.constant 0 : index
    %41 = vector.load %arg4[%c0_19, %c0_20, %c0_21] : memref<1x8x128xf32, #tpu.memory_space<vmem>>, vector<1x8x128xf32>
    tpu.vector_store %arg4[%c0_19, %c0_20, %c0_21], %40 {strides = array<i32>} : memref<1x8x128xf32, #tpu.memory_space<vmem>>, vector<1x8x128xf32>,
    %c0_22 = arith.constant 0 : index
    %c0_23 = arith.constant 0 : index
    %c0_24 = arith.constant 0 : index
    %42 = vector.load %arg5[%c0_22, %c0_23, %c0_24] : memref<1x8x128xf32, #tpu.memory_space<vmem>>, vector<1x8x128xf32>
    %43 = vector.shape_cast %34 : vector<8x128xf32> to vector<1x8x128xf32>
    %44 = arith.addf %42, %43 : vector<1x8x128xf32>
    %c0_25 = arith.constant 0 : index
    %c0_26 = arith.constant 0 : index
    %c0_27 = arith.constant 0 : index
    %45 = vector.load %arg5[%c0_25, %c0_26, %c0_27] : memref<1x8x128xf32, #tpu.memory_space<vmem>>, vector<1x8x128xf32>
    tpu.vector_store %arg5[%c0_25, %c0_26, %c0_27], %44 {strides = array<i32>} : memref<1x8x128xf32, #tpu.memory_space<vmem>>, vector<1x8x128xf32>,
    return
  }
  func.func @transform_0(%arg0: i32, %arg1: i32) -> (i32, i32) {
    %c1_i32 = arith.constant 1 : i32
    %0 = arith.muli %arg0, %c1_i32 : i32
    %1 = arith.addi %0, %arg1 : i32
    %c0_i32 = arith.constant 0 : i32
    %2 = arith.minsi %1, %c0_i32 : i32
    %c0_i32_0 = arith.constant 0 : i32
    %c0_i32_1 = arith.constant 0 : i32
    return %2, %c0_i32_0 : i32, i32
  }
  func.func @transform_1(%arg0: i32, %arg1: i32) -> (i32, i32) {
    %c1_i32 = arith.constant 1 : i32
    %0 = arith.muli %arg0, %c1_i32 : i32
    %1 = arith.addi %0, %arg1 : i32
    %c0_i32 = arith.constant 0 : i32
    %2 = arith.minsi %1, %c0_i32 : i32
    %c0_i32_0 = arith.constant 0 : i32
    %c0_i32_1 = arith.constant 0 : i32
    return %2, %c0_i32_0 : i32, i32
  }
  func.func @transform_2(%arg0: i32, %arg1: i32) -> (i32, i32, i32) {
    %c0_i32 = arith.constant 0 : i32
    %c0_i32_0 = arith.constant 0 : i32
    %c0_i32_1 = arith.constant 0 : i32
    return %arg0, %c0_i32, %c0_i32_0 : i32, i32, i32
  }
  func.func @transform_3(%arg0: i32, %arg1: i32) -> (i32, i32, i32) {
    %c0_i32 = arith.constant 0 : i32
    %c0_i32_0 = arith.constant 0 : i32
    %c0_i32_1 = arith.constant 0 : i32
    return %arg0, %c0_i32, %c0_i32_0 : i32, i32, i32
  }
}

</mosaic_0001>

<llo_original>
// kernel: tpu_custom_call.1
$region0: #{tpu_custom_call.1}
  #allocation0 [shape = 'u32[]', space=smem, size = 0x4, offset = 0x4, fixed_abs, tag = 'smem constant byte address 0x4 - core index']
  #allocation1 [shape = 'u32[144,128]{1,0:T(1,128)}', space=vmem, size = 0x12000, scoped, tag = 'internal scratch']
  %s0 = inlined_call_operand.hbm [shape: f32[16,128], index: 0, kind: input, shape index: {}]
  %s1 = inlined_call_operand.hbm [shape: f32[16,128], index: 1, kind: input, shape index: {}]
  %s2 = inlined_call_operand.hbm [shape: f32[1,8,128], index: 2, kind: output, shape index: {0}]
  %s3 = inlined_call_operand.hbm [shape: f32[1,8,128], index: 3, kind: output, shape index: {1}]
  %4 = xla_tuple %s2, %s3
  %s5 = sld [smem:[#allocation0]]
  $region38: #{tpu_custom_call.1} parent=0
    _
  %s7 = ssub.s32 1, %s5
  %s8 = scalar_select 0, %s7, %s5
  $region1: #{tpu_custom_call.1} parent=0
    #allocation2 [shape = 'u8[8192]{0}', space=vmem, size = 0x2000, scoped, tag = 'input window, operand 0, single buffered']
    #allocation3 [shape = 's32[1]{0}', space=sflag, size = 0x4, scoped, tag = 'scoped memory for tpu_custom_call.1']
    #allocation4 [shape = 's32[1]{0}', space=sflag, size = 0x4, scoped, tag = 'scoped memory for tpu_custom_call.1']
    #allocation5 [shape = 'u8[8192]{0}', space=vmem, size = 0x2000, scoped, tag = 'input window, operand 1, single buffered']
    #allocation6 [shape = 's32[1]{0}', space=sflag, size = 0x4, scoped, tag = 'scoped memory for tpu_custom_call.1']
    #allocation7 [shape = 'u8[4096]{0}', space=vmem, size = 0x1000, scoped, tag = 'output window, operand 0, single buffered']
    #allocation8 [shape = 'u8[4096]{0}', space=vmem, size = 0x1000, scoped, tag = 'output window, operand 1, single buffered']
    #allocation9 [shape = 's32[1]{0}', space=sflag, size = 0x4, scoped, tag = 'scoped memory for tpu_custom_call.1']
    %9 = vsyncpa [#allocation3], 0
    %10 = vsyncpa [#allocation6], 0
    %11 = vsyncpa [#allocation4], 0
    %12 = vsyncpa [#allocation9], 0
    // Predicated region
    $region2: #{tpu_custom_call.1} parent=1 // pred_check
      _
    $region3: #{tpu_custom_call.1} parent=1 // pred_check_branch
      %14 = sbr.rel (0) target = $region5
    $region4: #{tpu_custom_call.1} parent=1 // pred_region
      %s15 = sadd.s32 0, 0
      %p16 = scmp.lt.s32.totalorder %s15, 0
      %s17 = scalar_select %p16, %s15, 0
      %s18 = smul.u32 2, %s17
      %s20 = ssub.s32 256, 256
      %21 = vsyncadd [#allocation3], %s20
      %s22 = smul.addr %s18, 128
      %s23 = scalar_lea.hbm %s0, %s22
      %s24 = sshll.u32 [#allocation2], 4
      %s25 = int_to_ptr.vmem [resolvable:$true] %s24
      %30 = dma.hbm_to_vmem [thread:$0]  %s23, 256, %s25, [#allocation3], 128, 128, 8
    $region5: #{tpu_custom_call.1} parent=1 // pred_fallthru
      _
    // Predicated region
    $region6: #{tpu_custom_call.1} parent=1 // pred_check
      _
    $region7: #{tpu_custom_call.1} parent=1 // pred_check_branch
      %32 = sbr.rel (0) target = $region9
    $region8: #{tpu_custom_call.1} parent=1 // pred_region
      %s33 = sadd.s32 0, 0
      %p34 = scmp.lt.s32.totalorder %s33, 0
      %s35 = scalar_select %p34, %s33, 0
      %s36 = smul.u32 2, %s35
      %s38 = ssub.s32 256, 256
      %39 = vsyncadd [#allocation6], %s38
      %s40 = smul.addr %s36, 128
      %s41 = scalar_lea.hbm %s1, %s40
      %s42 = sshll.u32 [#allocation5], 4
      %s43 = int_to_ptr.vmem [resolvable:$true] %s42
      %48 = dma.hbm_to_vmem [thread:$0]  %s41, 256, %s43, [#allocation6], 128, 128, 8
    $region9: #{tpu_custom_call.1} parent=1 // pred_fallthru
      _
    // Predicated region
    $region10: #{tpu_custom_call.1} parent=1 // pred_check
      _
    $region11: #{tpu_custom_call.1} parent=1 // pred_check_branch
      %50 = sbr.rel (0) target = $region13
    $region12: #{tpu_custom_call.1} parent=1 // pred_region
      %51 = dma.done [#allocation3], 256
    $region13: #{tpu_custom_call.1} parent=1 // pred_fallthru
      _
    // Predicated region
    $region14: #{tpu_custom_call.1} parent=1 // pred_check
      _
    $region15: #{tpu_custom_call.1} parent=1 // pred_check_branch
      %53 = sbr.rel (0) target = $region17
    $region16: #{tpu_custom_call.1} parent=1 // pred_region
      %54 = dma.done [#allocation6], 256
    $region17: #{tpu_custom_call.1} parent=1 // pred_fallthru
      _
    %s55 = sadd.s32 0, 0
    %p56 = scmp.lt.s32.totalorder %s55, 0
    %s57 = scalar_select %p56, %s55, 0
    %s58 = smul.u32 2, %s57
    %s59 = sadd.s32 0, 0
    %p60 = scmp.lt.s32.totalorder %s59, 0
    %s61 = scalar_select %p60, %s59, 0
    %s62 = smul.u32 2, %s61
    %v63 = vld [vmem:[#allocation2] sm:$0xff]
    %v64 = vld [vmem:[#allocation2 + $0x8] sm:$0xff]
    %v65 = vld [vmem:[#allocation5] sm:$0xff]
    %v66 = vld [vmem:[#allocation5 + $0x8] sm:$0xff]
    %vm67 = vcmp.eq.f32.partialorder %v65, 1.0
    %vm68 = vcmp.eq.f32.partialorder %v66, 1.0
    %vm69 = vcmp.lt.f32.partialorder %v65, 1.0
    %vm70 = vcmp.lt.f32.partialorder %v66, 1.0
    %v71 = vsub.f32 1.0, %v63
    %v72 = vsub.f32 1.0, %v64
    %v73 = vmul.f32 %v71, %v71
    %v74 = vmul.f32 %v72, %v72
    %v75 = vmul.f32 %v63, %v63
    %v76 = vmul.f32 %v64, %v64
    %v77 = vsub.f32 1.0, %v65
    %v78 = vsub.f32 1.0, %v66
    %v79 = vmul.f32 %v77, %v77
    %v80 = vmul.f32 %v78, %v78
    %v81 = vmul.f32 %v79, %v79
    %v82 = vmul.f32 %v80, %v80
    %v83 = vmul.f32 %v73, 0.5
    %v84 = vmul.f32 %v74, 0.5
    %v85 = vsel %vm67, %v83, 0.0
    %v86 = vsel %vm68, %v84, 0.0
    %v87 = vmul.f32 %v81, 0.5
    %v88 = vmul.f32 %v82, 0.5
    %v89 = vmul.f32 %v87, %v75
    %v90 = vmul.f32 %v88, %v76
    %v91 = vsel %vm69, %v89, 0.0
    %v92 = vsel %vm70, %v90, 0.0
    %v93 = vsel %vm67, %v63, %v71
    %v94 = vsel %vm68, %v64, %v72
    %v95 = vadd.f32 %v85, %v91
    %v96 = vadd.f32 %v86, %v92
    %v97 = vlog2.pop %v93
    %v98 = vmul.f32 %v97, 0.6931472
    %v99 = vlog2.pop %v94
    %v100 = vmul.f32 %v99, 0.6931472
    %v101 = vmul.f32 %v95, %v98
    %v102 = vmul.f32 %v96, %v100
    %v103 = vsel %vm67, 1.0, 0.0
    %v104 = vsel %vm68, 1.0, 0.0
    %v105 = vadd.f32 %v101, %v102
    %v106 = vadd.f32 %v103, %v104
    %p107 = scmp.eq.s32.totalorder 0, 0
    // Predicated region
    $region18: #{tpu_custom_call.1} parent=1 // pred_check
      %p108 = pneg %p107
    $region19: #{tpu_custom_call.1} parent=1 // pred_check_branch
      %110 = sbr.rel (%p108) target = $region21
    $region20: #{tpu_custom_call.1} parent=1 // pred_region
      %111 = vst [vmem:[#allocation7] sm:$0xff] 0.0
      %112 = vst [vmem:[#allocation8] sm:$0xff] 0.0
    $region21: #{tpu_custom_call.1} parent=1 // pred_fallthru
      _
    %v113 = vld [vmem:[#allocation7] sm:$0xff]
    %v114 = vadd.f32 %v113, %v105
    %115 = vst [vmem:[#allocation7] sm:$0xff] %v114
    %v116 = vld [vmem:[#allocation8] sm:$0xff]
    %v117 = vadd.f32 %v116, %v106
    %118 = vst [vmem:[#allocation8] sm:$0xff] %v117
    // Predicated region
    $region22: #{tpu_custom_call.1} parent=1 // pred_check
      _
    $region23: #{tpu_custom_call.1} parent=1 // pred_check_branch
      %120 = sbr.rel (0) target = $region25
    $region24: #{tpu_custom_call.1} parent=1 // pred_region
      %s122 = ssub.s32 128, 128
      %123 = vsyncadd [#allocation4], %s122
      %s125 = sshll.u32 [#allocation7], 4
      %s126 = int_to_ptr.vmem [resolvable:$true] %s125
      %128 = dma.vmem_to_hbm [thread:$0]  %s126, 128, %s2, [#allocation4]
    $region25: #{tpu_custom_call.1} parent=1 // pred_fallthru
      _
    // Predicated region
    $region26: #{tpu_custom_call.1} parent=1 // pred_check
      _
    $region27: #{tpu_custom_call.1} parent=1 // pred_check_branch
      %130 = sbr.rel (0) target = $region29
    $region28: #{tpu_custom_call.1} parent=1 // pred_region
      %s132 = ssub.s32 128, 128
      %133 = vsyncadd [#allocation9], %s132
      %s135 = sshll.u32 [#allocation8], 4
      %s136 = int_to_ptr.vmem [resolvable:$true] %s135
      %138 = dma.vmem_to_hbm [thread:$0]  %s136, 128, %s3, [#allocation9]
    $region29: #{tpu_custom_call.1} parent=1 // pred_fallthru
      _
    // Predicated region
    $region30: #{tpu_custom_call.1} parent=1 // pred_check
      _
    $region31: #{tpu_custom_call.1} parent=1 // pred_check_branch
      %140 = sbr.rel (0) target = $region33
    $region32: #{tpu_custom_call.1} parent=1 // pred_region
      %141 = dma.done [#allocation4], 128
    $region33: #{tpu_custom_call.1} parent=1 // pred_fallthru
      _
    // Predicated region
    $region34: #{tpu_custom_call.1} parent=1 // pred_check
      _
    $region35: #{tpu_custom_call.1} parent=1 // pred_check_branch
      %143 = sbr.rel (0) target = $region37
    $region36: #{tpu_custom_call.1} parent=1 // pred_region
      %144 = dma.done [#allocation9], 128
    $region37: #{tpu_custom_call.1} parent=1 // pred_fallthru
      _
    %145 = vsyncpa [#allocation3], 1
    %146 = vsyncpa [#allocation6], 1
    %147 = vsyncpa [#allocation4], 1
    %148 = vsyncpa [#allocation9], 1

</llo_original>
